<compile_context>
chip_gen: v7x
topology: tpu7x:2x2x1
jax: 0.10.0
libtpu: 0.0.40
codegen_flags: <defaults>
</compile_context>

<pallas_src>
import jax
import jax.numpy as jnp
from jax import lax
from jax.experimental import pallas as pl
from jax.experimental.pallas import tpu as pltpu

LANES = 128
SUBLANES = 8
GROUP = SUBLANES * LANES          # 1024 elements = one (8, 128) f32 vreg-group
MAX_BLOCK_GROUPS = 512            # (512, 8, 128) f32 = 2 MiB per input block


def _make_partial_sqsum_kernel(groups, block_groups):
    """Kernel: per grid step, write an (8,128) partial sum of (x - y)^2."""
    needs_mask = (groups % block_groups) != 0

    def kernel(x_ref, y_ref, o_ref):
        # Cast inside the kernel (no wrapper-side astype -> no extra HBM
        # bytes for non-f32 inputs).
        d = x_ref[...].astype(jnp.float32) - y_ref[...].astype(jnp.float32)
        sq = d * d  # (block_groups, 8, 128)

        if needs_mask:
            i = pl.program_id(0)
            last = pl.num_programs(0) - 1

            @pl.when(i != last)
            def _full():
                o_ref[...] = jnp.sum(sq, axis=0, keepdims=True)

            @pl.when(i == last)
            def _masked():
                gid = i * block_groups + lax.broadcasted_iota(
                    jnp.int32, sq.shape, 0
                )
                o_ref[...] = jnp.sum(
                    jnp.where(gid < groups, sq, 0.0), axis=0, keepdims=True
                )
        else:
            o_ref[...] = jnp.sum(sq, axis=0, keepdims=True)

    return kernel


@jax.jit
def mse_loss(x, y):
    """Pallas TPU equivalent of torch.nn.MSELoss()(x, y) (mean reduction)."""
    assert x.shape == y.shape, "MSELoss requires matching shapes"
    n_elem = x.size
    assert n_elem > 0

    xf = jnp.ravel(x)
    yf = jnp.ravel(y)

    groups = n_elem // GROUP          # full (8, 128) groups
    bulk = groups * GROUP
    total = jnp.float32(0.0)

    if groups >= 1:
        block_groups = min(MAX_BLOCK_GROUPS, groups)
        grid0 = pl.cdiv(groups, block_groups)

        x3 = xf[:bulk].reshape(groups, SUBLANES, LANES)
        y3 = yf[:bulk].reshape(groups, SUBLANES, LANES)

        partials = pl.pallas_call(
            _make_partial_sqsum_kernel(groups, block_groups),
            out_shape=jax.ShapeDtypeStruct(
                (grid0, SUBLANES, LANES), jnp.float32
            ),
            grid=(grid0,),
            in_specs=[
                pl.BlockSpec(
                    (block_groups, SUBLANES, LANES), lambda i: (i, 0, 0)
                ),
                pl.BlockSpec(
                    (block_groups, SUBLANES, LANES), lambda i: (i, 0, 0)
                ),
            ],
            out_specs=pl.BlockSpec(
                (1, SUBLANES, LANES), lambda i: (i, 0, 0)
            ),
            compiler_params=pltpu.CompilerParams(
                dimension_semantics=("parallel",)
            ),
        )(x3, y3)

        # Tiny final reduction over (grid0, 8, 128) partials (fused XLA op).
        total = total + jnp.sum(partials)

    if bulk < n_elem:
        # Tiny plain-JAX epilogue: flat remainder (< 1024 elems) and/or inputs
        # too small for a single (8, 128) tile.
        tx = xf[bulk:].astype(jnp.float32)
        ty = yf[bulk:].astype(jnp.float32)
        td = tx - ty
        total = total + jnp.sum(td * td)

    return (total / jnp.float32(n_elem)).astype(jnp.float32)


if __name__ == "__main__":
    key = jax.random.PRNGKey(0)
    kx, ky = jax.random.split(key)

    # Small shapes consistent with a generic (B, C, H, W) input.
    x = jax.random.normal(kx, (2, 4, 16, 16), dtype=jnp.float32)
    y = jax.random.normal(ky, (2, 4, 16, 16), dtype=jnp.float32)

    loss = mse_loss(x, y)
    jax.block_until_ready(loss)

    # Reference check against plain JAX.
    ref = jnp.mean((x.astype(jnp.float32) - y.astype(jnp.float32)) ** 2)
    assert jnp.allclose(loss, ref, rtol=1e-6, atol=1e-6), (loss, ref)

    print("KERNEL_OK")
</pallas_src>

<mosaic_0001>
module attributes {stable_mosaic.version = 11 : i64} {
  func.func @kernel(%arg0: i32, %arg1: memref<2x8x128xf32, #tpu.memory_space<vmem>>, %arg2: memref<2x8x128xf32, #tpu.memory_space<vmem>>, %arg3: memref<1x8x128xf32, #tpu.memory_space<vmem>>) attributes {dimension_semantics = [#tpu.dimension_semantics<parallel>], iteration_bounds = array<i64: 1>, scalar_prefetch = 0 : i64, scratch_operands = 0 : i64, tpu.core_type = #tpu.core_type<tc>, window_params = [{transform_indices = @transform_0, window_bounds = array<i64: 2, 8, 128>}, {transform_indices = @transform_1, window_bounds = array<i64: 2, 8, 128>}, {transform_indices = @transform_2, window_bounds = array<i64: 1, 8, 128>}]} {
    %c0 = arith.constant 0 : index
    %c0_0 = arith.constant 0 : index
    %c0_1 = arith.constant 0 : index
    %0 = vector.load %arg1[%c0, %c0_0, %c0_1] : memref<2x8x128xf32, #tpu.memory_space<vmem>>, vector<2x8x128xf32>
    %c0_2 = arith.constant 0 : index
    %c0_3 = arith.constant 0 : index
    %c0_4 = arith.constant 0 : index
    %1 = vector.load %arg2[%c0_2, %c0_3, %c0_4] : memref<2x8x128xf32, #tpu.memory_space<vmem>>, vector<2x8x128xf32>
    %2 = arith.subf %0, %1 : vector<2x8x128xf32>
    %3 = arith.mulf %2, %2 : vector<2x8x128xf32>
    %cst = arith.constant dense<0.000000e+00> : vector<8x128xf32>
    %4 = vector.multi_reduction <add>, %3, %cst [0] : vector<2x8x128xf32> to vector<8x128xf32>
    %5 = vector.shape_cast %4 : vector<8x128xf32> to vector<1x8x128xf32>
    %c0_5 = arith.constant 0 : index
    %c0_6 = arith.constant 0 : index
    %c0_7 = arith.constant 0 : index
    %6 = vector.load %arg3[%c0_5, %c0_6, %c0_7] : memref<1x8x128xf32, #tpu.memory_space<vmem>>, vector<1x8x128xf32>
    tpu.vector_store %arg3[%c0_5, %c0_6, %c0_7], %5 {strides = array<i32>} : memref<1x8x128xf32, #tpu.memory_space<vmem>>, vector<1x8x128xf32>,
    return
  }
  func.func @transform_0(%arg0: i32) -> (i32, i32, i32) {
    %c0_i32 = arith.constant 0 : i32
    %c0_i32_0 = arith.constant 0 : i32
    %c0_i32_1 = arith.constant 0 : i32
    return %arg0, %c0_i32, %c0_i32_0 : i32, i32, i32
  }
  func.func @transform_1(%arg0: i32) -> (i32, i32, i32) {
    %c0_i32 = arith.constant 0 : i32
    %c0_i32_0 = arith.constant 0 : i32
    %c0_i32_1 = arith.constant 0 : i32
    return %arg0, %c0_i32, %c0_i32_0 : i32, i32, i32
  }
  func.func @transform_2(%arg0: i32) -> (i32, i32, i32) {
    %c0_i32 = arith.constant 0 : i32
    %c0_i32_0 = arith.constant 0 : i32
    %c0_i32_1 = arith.constant 0 : i32
    return %arg0, %c0_i32, %c0_i32_0 : i32, i32, i32
  }
}

</mosaic_0001>

<llo_original>
// kernel: mse_loss.1
$region0: #{mse_loss.1}
  #allocation0 [shape = 'u32[]', space=smem, size = 0x4, offset = 0x4, fixed_abs, tag = 'smem constant byte address 0x4 - core index']
  #allocation1 [shape = 'u32[144,128]{1,0:T(1,128)}', space=vmem, size = 0x12000, scoped, tag = 'internal scratch']
  %s0 = inlined_call_operand.vmem [shape: f32[2,8,128], index: 0, kind: input, shape index: {}]
  %s1 = inlined_call_operand.vmem [shape: f32[2,8,128], index: 1, kind: input, shape index: {}]
  %s2 = inlined_call_operand.vmem [shape: f32[1,8,128], index: 2, kind: output, shape index: {}]
  %s3 = sld [smem:[#allocation0]]
  $region18: #{mse_loss.1} parent=0
    _
  %s5 = ssub.s32 1, %s3
  %s6 = scalar_select 0, %s5, %s3
  // Predicated region
  $region2: #{mse_loss.1} parent=0 // pred_check
    _
  $region3: #{mse_loss.1} parent=0 // pred_check_branch
    %8 = sbr.rel (0) target = $region5
  $region4: #{mse_loss.1} parent=0 // pred_region
    _
  $region5: #{mse_loss.1} parent=0 // pred_fallthru
    _
  // Predicated region
  $region6: #{mse_loss.1} parent=0 // pred_check
    _
  $region7: #{mse_loss.1} parent=0 // pred_check_branch
    %10 = sbr.rel (0) target = $region9
  $region8: #{mse_loss.1} parent=0 // pred_region
    _
  $region9: #{mse_loss.1} parent=0 // pred_fallthru
    _
  %v11 = vld [vmem:[%s0] sm:$0xff]
  %v12 = vld [vmem:[%s0 + $0x8] sm:$0xff]
  %v13 = vld [vmem:[%s1] sm:$0xff]
  %v14 = vld [vmem:[%s1 + $0x8] sm:$0xff]
  %v15 = vsub.f32 %v11, %v13
  %v16 = vsub.f32 %v12, %v14
  %v17 = vmul.f32 %v15, %v15
  %v18 = vmul.f32 %v16, %v16
  %v19 = vadd.f32 %v17, %v18
  %20 = vst [vmem:[%s2] sm:$0xff] %v19
  // Predicated region
  $region10: #{mse_loss.1} parent=0 // pred_check
    _
  $region11: #{mse_loss.1} parent=0 // pred_check_branch
    %22 = sbr.rel (0) target = $region13
  $region12: #{mse_loss.1} parent=0 // pred_region
    _
  $region13: #{mse_loss.1} parent=0 // pred_fallthru
    _
  // Predicated region
  $region14: #{mse_loss.1} parent=0 // pred_check
    _
  $region15: #{mse_loss.1} parent=0 // pred_check_branch
    %24 = sbr.rel (0) target = $region17
  $region16: #{mse_loss.1} parent=0 // pred_region
    _
  $region17: #{mse_loss.1} parent=0 // pred_fallthru
    _

</llo_original>
